<compile_context>
chip_gen: v6e
topology: v6e:2x2x1
jax: 0.10.0
libtpu: 0.0.40
codegen_flags: <defaults>
</compile_context>

<pallas_src>
import functools
import math

import jax
import jax.numpy as jnp
from jax.experimental import pallas as pl
from jax.experimental.pallas import tpu as pltpu


def _pos2weight_kernel(x_ref, w1_ref, b1_ref, w2_ref, b2_ref, o_ref):
    # x_ref : (TM, 3)            f32 tile of position codes
    # w1_ref: (3, 256)           f32 first linear weight (full, resident)
    # b1_ref: (1, 256)           f32 first linear bias
    # w2_ref: (256, OUT_PAD)     bf16 second linear weight (lane-padded)
    # b2_ref: (1, OUT_PAD)       f32 second linear bias (lane-padded)
    # o_ref : (TM, OUT_PAD)      f32 output tile (lane-dense)
    x = x_ref[...]                       # (TM, 3)
    w1 = w1_ref[...]                     # (3, 256)

    # Layer 1: K=3 contraction done as three VPU broadcast-FMAs (MXU stays
    # free for the real matmul below).  All in f32.
    h = b1_ref[...]                      # (1, 256) -> broadcasts to (TM, 256)
    h = h + x[:, 0:1] * w1[0:1, :]
    h = h + x[:, 1:2] * w1[1:2, :]
    h = h + x[:, 2:3] * w1[2:3, :]
    h = jnp.maximum(h, 0.0)              # ReLU on the VPU

    # Layer 2: MXU matmul, bf16 operands, f32 accumulation.
    out = jnp.dot(h.astype(jnp.bfloat16), w2_ref[...],
                  preferred_element_type=jnp.float32)
    o_ref[...] = (out + b2_ref[...]).astype(o_ref.dtype)


@functools.partial(jax.jit, static_argnames=("tm",))
def pos2weight_forward(x, w1, b1, w2, b2, *, tm=1024):
    """x: (N, 3) f32; w1: (3,256); b1: (1,256); w2: (256,out_dim); b2: (1,out_dim).

    Returns (N, out_dim) f32 = Linear2(ReLU(Linear1(x))).
    """
    N, _ = x.shape
    out_dim = w2.shape[1]

    # Lane-dense output: pad out_dim up to a multiple of 128.
    out_pad = ((out_dim + 127) // 128) * 128
    # Arbitrary N: pad rows up to a multiple of the (large) row tile.
    n_blocks = pl.cdiv(N, tm)
    n_pad = n_blocks * tm

    x_p = jnp.pad(x, ((0, n_pad - N), (0, 0)))
    w2_p = jnp.pad(w2, ((0, 0), (0, out_pad - out_dim))).astype(jnp.bfloat16)
    b2_p = jnp.pad(b2, ((0, 0), (0, out_pad - out_dim))).astype(jnp.float32)

    cost = pl.CostEstimate(
        flops=2 * n_pad * (3 * 256 + 256 * out_pad),
        transcendentals=0,
        bytes_accessed=(4 * n_pad * 3           # x
                        + 4 * 3 * 256 + 4 * 256  # w1, b1
                        + 2 * 256 * out_pad      # w2 (bf16)
                        + 4 * out_pad            # b2
                        + 4 * n_pad * out_pad),  # output writeback (dominant)
    )

    # Explicit VMEM budget for the chosen tile (double-buffered x/out tiles,
    # double-buffered bf16 W2, layer-1 temporaries, headroom).  Capped at
    # 48 MiB so it is safe on v7x (64 MiB physical VMEM per TensorCore).
    vmem_need = (2 * tm * out_pad * 4
                 + 2 * tm * 128 * 4
                 + 2 * 256 * out_pad * 2
                 + 2 * tm * 256 * 4
                 + (2 << 20))
    vmem_limit = int(min(max(vmem_need, 32 << 20), 48 << 20))

    out = pl.pallas_call(
        _pos2weight_kernel,
        out_shape=jax.ShapeDtypeStruct((n_pad, out_pad), jnp.float32),
        grid_spec=pltpu.PrefetchScalarGridSpec(
            num_scalar_prefetch=0,
            grid=(n_blocks,),
            in_specs=[
                pl.BlockSpec((tm, 3), lambda i: (i, 0)),         # x tile
                pl.BlockSpec((3, 256), lambda i: (0, 0)),        # W1 (full)
                pl.BlockSpec((1, 256), lambda i: (0, 0)),        # b1
                pl.BlockSpec((256, out_pad), lambda i: (0, 0)),  # W2 (full, bf16)
                pl.BlockSpec((1, out_pad), lambda i: (0, 0)),    # b2
            ],
            out_specs=pl.BlockSpec((tm, out_pad), lambda i: (i, 0)),
        ),
        compiler_params=pltpu.CompilerParams(
            dimension_semantics=("parallel",),
            vmem_limit_bytes=vmem_limit,
        ),
        cost_estimate=cost,
    )(x_p, w1, b1, w2_p, b2_p)

    return out[:N, :out_dim]


def init_pos2weight_params(key, in_c, kernel_size=3, out_c=1):
    """Mimics PyTorch nn.Linear default init: U(-1/sqrt(fan_in), 1/sqrt(fan_in))."""
    out_dim = kernel_size * kernel_size * in_c * out_c
    k1, k2, k3, k4 = jax.random.split(key, 4)

    bound1 = 1.0 / math.sqrt(3.0)
    w1 = jax.random.uniform(k1, (3, 256), jnp.float32, -bound1, bound1)
    b1 = jax.random.uniform(k2, (1, 256), jnp.float32, -bound1, bound1)

    bound2 = 1.0 / math.sqrt(256.0)
    w2 = jax.random.uniform(k3, (256, out_dim), jnp.float32, -bound2, bound2)
    b2 = jax.random.uniform(k4, (1, out_dim), jnp.float32, -bound2, bound2)
    return w1, b1, w2, b2


def pos2weight_reference(x, w1, b1, w2, b2):
    h = jnp.maximum(x @ w1 + b1, 0.0)
    return h @ w2 + b2


if __name__ == "__main__":
    in_c = 4            # small channel count for the demo
    kernel_size = 3
    out_c = 1
    out_dim = kernel_size * kernel_size * in_c * out_c   # 36 -> padded to 128
    N = 300             # number of position rows; NOT a multiple of the tile

    key = jax.random.PRNGKey(0)
    kx, kp = jax.random.split(key)

    # Position codes: (rel_y, rel_x, 1/scale) style inputs in [0, 1).
    x = jax.random.uniform(kx, (N, 3), jnp.float32)
    w1, b1, w2, b2 = init_pos2weight_params(kp, in_c, kernel_size, out_c)

    # Small row tile for the demo so the grid has >1 step; default is 1024.
    out = pos2weight_forward(x, w1, b1, w2, b2, tm=128)
    out = jax.block_until_ready(out)

    ref = pos2weight_reference(x, w1, b1, w2, b2)
    assert out.shape == (N, out_dim)
    # Tolerance relaxed because layer-2 operands run in bf16 (f32 accumulate).
    assert jnp.allclose(out, ref, atol=5e-2, rtol=5e-2), float(
        jnp.max(jnp.abs(out - ref)))

    print("KERNEL_OK")
</pallas_src>

<mosaic_0001>
module attributes {stable_mosaic.version = 11 : i64} {
  func.func @_pos2weight_kernel(%arg0: i32, %arg1: memref<128x3xf32, #tpu.memory_space<vmem>>, %arg2: memref<3x256xf32, #tpu.memory_space<vmem>>, %arg3: memref<1x256xf32, #tpu.memory_space<vmem>>, %arg4: memref<256x128xbf16, #tpu.memory_space<vmem>>, %arg5: memref<1x128xf32, #tpu.memory_space<vmem>>, %arg6: memref<128x128xf32, #tpu.memory_space<vmem>>) attributes {dimension_semantics = [#tpu.dimension_semantics<parallel>], iteration_bounds = array<i64: 3>, scalar_prefetch = 0 : i64, scratch_operands = 0 : i64, tpu.core_type = #tpu.core_type<tc>, window_params = [{transform_indices = @transform_0, window_bounds = array<i64: 128, 3>}, {pipeline_mode = #tpu.pipeline_mode<synchronous>, transform_indices = @transform_1, window_bounds = array<i64: 3, 256>}, {pipeline_mode = #tpu.pipeline_mode<synchronous>, transform_indices = @transform_2, window_bounds = array<i64: 1, 256>}, {pipeline_mode = #tpu.pipeline_mode<synchronous>, transform_indices = @transform_3, window_bounds = array<i64: 256, 128>}, {pipeline_mode = #tpu.pipeline_mode<synchronous>, transform_indices = @transform_4, window_bounds = array<i64: 1, 128>}, {transform_indices = @transform_5, window_bounds = array<i64: 128, 128>}]} {
    %c0 = arith.constant 0 : index
    %c0_0 = arith.constant 0 : index
    %0 = vector.load %arg1[%c0, %c0_0] : memref<128x3xf32, #tpu.memory_space<vmem>>, vector<128x3xf32>
    %c0_1 = arith.constant 0 : index
    %c0_2 = arith.constant 0 : index
    %1 = vector.load %arg2[%c0_1, %c0_2] : memref<3x256xf32, #tpu.memory_space<vmem>>, vector<3x256xf32>
    %c0_3 = arith.constant 0 : index
    %c0_4 = arith.constant 0 : index
    %2 = vector.load %arg3[%c0_3, %c0_4] : memref<1x256xf32, #tpu.memory_space<vmem>>, vector<1x256xf32>
    %3 = vector.extract_strided_slice %0 {offsets = [0, 0], sizes = [128, 1], strides = [1, 1]} : vector<128x3xf32> to vector<128x1xf32>
    %4 = vector.extract_strided_slice %1 {offsets = [0, 0], sizes = [1, 256], strides = [1, 1]} : vector<3x256xf32> to vector<1x256xf32>
    %5 = vector.broadcast %3 : vector<128x1xf32> to vector<128x256xf32>
    %6 = vector.broadcast %4 : vector<1x256xf32> to vector<128x256xf32>
    %7 = arith.mulf %5, %6 : vector<128x256xf32>
    %8 = vector.broadcast %2 : vector<1x256xf32> to vector<128x256xf32>
    %9 = arith.addf %8, %7 : vector<128x256xf32>
    %10 = vector.extract_strided_slice %0 {offsets = [0, 1], sizes = [128, 1], strides = [1, 1]} : vector<128x3xf32> to vector<128x1xf32>
    %11 = vector.extract_strided_slice %1 {offsets = [1, 0], sizes = [1, 256], strides = [1, 1]} : vector<3x256xf32> to vector<1x256xf32>
    %12 = vector.broadcast %10 : vector<128x1xf32> to vector<128x256xf32>
    %13 = vector.broadcast %11 : vector<1x256xf32> to vector<128x256xf32>
    %14 = arith.mulf %12, %13 : vector<128x256xf32>
    %15 = arith.addf %9, %14 : vector<128x256xf32>
    %16 = vector.extract_strided_slice %0 {offsets = [0, 2], sizes = [128, 1], strides = [1, 1]} : vector<128x3xf32> to vector<128x1xf32>
    %17 = vector.extract_strided_slice %1 {offsets = [2, 0], sizes = [1, 256], strides = [1, 1]} : vector<3x256xf32> to vector<1x256xf32>
    %18 = vector.broadcast %16 : vector<128x1xf32> to vector<128x256xf32>
    %19 = vector.broadcast %17 : vector<1x256xf32> to vector<128x256xf32>
    %20 = arith.mulf %18, %19 : vector<128x256xf32>
    %21 = arith.addf %15, %20 : vector<128x256xf32>
    %cst = arith.constant 0.000000e+00 : f32
    %22 = vector.broadcast %cst : f32 to vector<128x256xf32>
    %23 = arith.maximumf %21, %22 : vector<128x256xf32>
    %24 = arith.truncf %23 : vector<128x256xf32> to vector<128x256xbf16>
    %c0_5 = arith.constant 0 : index
    %c0_6 = arith.constant 0 : index
    %25 = vector.load %arg4[%c0_5, %c0_6] : memref<256x128xbf16, #tpu.memory_space<vmem>>, vector<256x128xbf16>
    %cst_7 = arith.constant dense<0.000000e+00> : vector<128x128xf32>
    %26 = tpu.matmul %24, %25, %cst_7 {dimension_numbers = #tpu.dot_dimension_numbers<[1], [0], [0], [1], [0, 0, 1, 1], [], []>} : vector<128x256xbf16>, vector<256x128xbf16>, vector<128x128xf32> -> vector<128x128xf32>
    %c0_8 = arith.constant 0 : index
    %c0_9 = arith.constant 0 : index
    %27 = vector.load %arg5[%c0_8, %c0_9] : memref<1x128xf32, #tpu.memory_space<vmem>>, vector<1x128xf32>
    %28 = vector.broadcast %27 : vector<1x128xf32> to vector<128x128xf32>
    %29 = arith.addf %26, %28 : vector<128x128xf32>
    %c0_10 = arith.constant 0 : index
    %c0_11 = arith.constant 0 : index
    %30 = vector.load %arg6[%c0_10, %c0_11] : memref<128x128xf32, #tpu.memory_space<vmem>>, vector<128x128xf32>
    tpu.vector_store %arg6[%c0_10, %c0_11], %29 {strides = array<i32>} : memref<128x128xf32, #tpu.memory_space<vmem>>, vector<128x128xf32>,
    return
  }
  func.func @transform_0(%arg0: i32) -> (i32, i32) {
    %c0_i32 = arith.constant 0 : i32
    %c0_i32_0 = arith.constant 0 : i32
    return %arg0, %c0_i32 : i32, i32
  }
  func.func @transform_1(%arg0: i32) -> (i32, i32) {
    %c0_i32 = arith.constant 0 : i32
    %c0_i32_0 = arith.constant 0 : i32
    %c0_i32_1 = arith.constant 0 : i32
    return %c0_i32, %c0_i32_0 : i32, i32
  }
  func.func @transform_2(%arg0: i32) -> (i32, i32) {
    %c0_i32 = arith.constant 0 : i32
    %c0_i32_0 = arith.constant 0 : i32
    %c0_i32_1 = arith.constant 0 : i32
    return %c0_i32, %c0_i32_0 : i32, i32
  }
  func.func @transform_3(%arg0: i32) -> (i32, i32) {
    %c0_i32 = arith.constant 0 : i32
    %c0_i32_0 = arith.constant 0 : i32
    %c0_i32_1 = arith.constant 0 : i32
    return %c0_i32, %c0_i32_0 : i32, i32
  }
  func.func @transform_4(%arg0: i32) -> (i32, i32) {
    %c0_i32 = arith.constant 0 : i32
    %c0_i32_0 = arith.constant 0 : i32
    %c0_i32_1 = arith.constant 0 : i32
    return %c0_i32, %c0_i32_0 : i32, i32
  }
  func.func @transform_5(%arg0: i32) -> (i32, i32) {
    %c0_i32 = arith.constant 0 : i32
    %c0_i32_0 = arith.constant 0 : i32
    return %arg0, %c0_i32 : i32, i32
  }
}

</mosaic_0001>

<llo_original>
// kernel: pos2weight_forward.1
$region0: #{pos2weight_forward.1}
  #allocation0 [shape = 'u32[]', space=smem, size = 0x4, offset = 0x4, fixed_abs, tag = 'smem constant byte address 0x4 - core index']
  #allocation1 [shape = 'u32[144,128]{1,0:T(1,128)}', space=vmem, size = 0x12000, scoped, tag = 'internal scratch']
  %s0 = inlined_call_operand.vmem [shape: f32[384,3], index: 0, kind: input, shape index: {}]
  %s1 = inlined_call_operand.vmem [shape: f32[3,256], index: 1, kind: input, shape index: {}]
  %s2 = inlined_call_operand.vmem [shape: f32[1,256], index: 2, kind: input, shape index: {}]
  %s3 = inlined_call_operand.vmem [shape: bf16[256,128], index: 3, kind: input, shape index: {}]
  %s4 = inlined_call_operand.vmem [shape: f32[1,128], index: 4, kind: input, shape index: {}]
  %s5 = inlined_call_operand.vmem [shape: f32[384,128], index: 5, kind: output, shape index: {}]
  %s6 = sld [smem:[#allocation0]]
  $region53: #{pos2weight_forward.1} parent=0
    _
  %s8 = ssub.s32 1, %s6
  %s9 = scalar_select 0, %s8, %s6
  loop: start=0, step=1, limit=5
  $region2: #{pos2weight_forward.1} parent=0 // loop_pre_header
    _
  $region3: #{pos2weight_forward.1} parent=0 // loop_header
    %s11 = sphi 0, %s15
    %p12 = scmp.ge.s32.totalorder %s11, 5
    %s21 = sphi 0, %s23
    %s24 = sphi 0, %s21
    %s25 = sphi 0, %s24
    %s41 = sphi 0, %s25
    %s45 = sphi 0, %s45
    %s47 = sphi 0, %s45
    %s48 = sphi 0, %s47
    %s62 = sphi 0, %s48
    %s66 = sphi 0, %s66
    %s68 = sphi 0, %s66
    %s69 = sphi 0, %s68
    %s83 = sphi 0, %s69
    %s87 = sphi 0, %s87
    %s89 = sphi 0, %s87
    %s90 = sphi 0, %s89
    %s104 = sphi 0, %s90
    %s108 = sphi 0, %s108
    %s110 = sphi 0, %s108
    %s111 = sphi 0, %s110
    %s125 = sphi 0, %s111
    %s131 = sphi 0, %s133
    %s134 = sphi 0, %s131
    %s135 = sphi 0, %s134
    %s151 = sphi 0, %s135
  $region4: #{pos2weight_forward.1} parent=0 // loop_header_branch
    %14 = sbr.rel (%p12) target = $region8
  $region5: #{pos2weight_forward.1} parent=0 // loop_body
    %s16 = ssub.s32 %s11, 1
    %s17 = ssub.s32 %s11, 2
    %s18 = sadd.s32 %s11, 1
    %s19 = ssub.s32 %s11, %s18
    %p20 = scmp.eq.s32.totalorder %s19, 0
    %s22 = sadd.s32 %s21, 1
    %s23 = scalar_select %p20, %s21, %s22
    %p26 = pneg %p20
    %p27 = scmp.eq.s32.totalorder %s11, 2
    %p28 = por %p26, %p27
    %p29 = scmp.ne.s32.totalorder %s21, %s24
    %p30 = scmp.eq.s32.totalorder %s11, 0
    %p31 = por %p29, %p30
    %p32 = scmp.ne.s32.totalorder %s21, %s24
    %p33 = scmp.eq.s32.totalorder %s16, 2
    %p34 = por %p32, %p33
    %p35 = scmp.ne.s32.totalorder %s24, %s25
    %p36 = scmp.eq.s32.totalorder %s16, 0
    %p37 = por %p35, %p36
    %p38 = scmp.ne.s32.totalorder %s24, %s25
    %p39 = scmp.eq.s32.totalorder %s17, 2
    %p40 = por %p38, %p39
    %p42 = scmp.ne.s32.totalorder %s25, %s41
    %p43 = scmp.eq.s32.totalorder %s17, 0
    %p44 = por %p42, %p43
    %s46 = sadd.s32 %s45, 1
    %p49 = scmp.eq.s32.totalorder %s11, 2
    %p50 = scmp.ne.s32.totalorder %s45, %s47
    %p51 = scmp.eq.s32.totalorder %s11, 0
    %p52 = por %p50, %p51
    %p53 = scmp.ne.s32.totalorder %s45, %s47
    %p54 = scmp.eq.s32.totalorder %s16, 2
    %p55 = por %p53, %p54
    %p56 = scmp.ne.s32.totalorder %s47, %s48
    %p57 = scmp.eq.s32.totalorder %s16, 0
    %p58 = por %p56, %p57
    %p59 = scmp.ne.s32.totalorder %s47, %s48
    %p60 = scmp.eq.s32.totalorder %s17, 2
    %p61 = por %p59, %p60
    %p63 = scmp.ne.s32.totalorder %s48, %s62
    %p64 = scmp.eq.s32.totalorder %s17, 0
    %p65 = por %p63, %p64
    %s67 = sadd.s32 %s66, 1
    %p70 = scmp.eq.s32.totalorder %s11, 2
    %p71 = scmp.ne.s32.totalorder %s66, %s68
    %p72 = scmp.eq.s32.totalorder %s11, 0
    %p73 = por %p71, %p72
    %p74 = scmp.ne.s32.totalorder %s66, %s68
    %p75 = scmp.eq.s32.totalorder %s16, 2
    %p76 = por %p74, %p75
    %p77 = scmp.ne.s32.totalorder %s68, %s69
    %p78 = scmp.eq.s32.totalorder %s16, 0
    %p79 = por %p77, %p78
    %p80 = scmp.ne.s32.totalorder %s68, %s69
    %p81 = scmp.eq.s32.totalorder %s17, 2
    %p82 = por %p80, %p81
    %p84 = scmp.ne.s32.totalorder %s69, %s83
    %p85 = scmp.eq.s32.totalorder %s17, 0
    %p86 = por %p84, %p85
    %s88 = sadd.s32 %s87, 1
    %p91 = scmp.eq.s32.totalorder %s11, 2
    %p92 = scmp.ne.s32.totalorder %s87, %s89
    %p93 = scmp.eq.s32.totalorder %s11, 0
    %p94 = por %p92, %p93
    %p95 = scmp.ne.s32.totalorder %s87, %s89
    %p96 = scmp.eq.s32.totalorder %s16, 2
    %p97 = por %p95, %p96
    %p98 = scmp.ne.s32.totalorder %s89, %s90
    %p99 = scmp.eq.s32.totalorder %s16, 0
    %p100 = por %p98, %p99
    %p101 = scmp.ne.s32.totalorder %s89, %s90
    %p102 = scmp.eq.s32.totalorder %s17, 2
    %p103 = por %p101, %p102
    %p105 = scmp.ne.s32.totalorder %s90, %s104
    %p106 = scmp.eq.s32.totalorder %s17, 0
    %p107 = por %p105, %p106
    %s109 = sadd.s32 %s108, 1
    %p112 = scmp.eq.s32.totalorder %s11, 2
    %p113 = scmp.ne.s32.totalorder %s108, %s110
    %p114 = scmp.eq.s32.totalorder %s11, 0
    %p115 = por %p113, %p114
    %p116 = scmp.ne.s32.totalorder %s108, %s110
    %p117 = scmp.eq.s32.totalorder %s16, 2
    %p118 = por %p116, %p117
    %p119 = scmp.ne.s32.totalorder %s110, %s111
    %p120 = scmp.eq.s32.totalorder %s16, 0
    %p121 = por %p119, %p120
    %p122 = scmp.ne.s32.totalorder %s110, %s111
    %p123 = scmp.eq.s32.totalorder %s17, 2
    %p124 = por %p122, %p123
    %p126 = scmp.ne.s32.totalorder %s111, %s125
    %p127 = scmp.eq.s32.totalorder %s17, 0
    %p128 = por %p126, %p127
    %s129 = ssub.s32 %s11, %s18
    %p130 = scmp.eq.s32.totalorder %s129, 0
    %s132 = sadd.s32 %s131, 1
    %s133 = scalar_select %p130, %s131, %s132
    %p136 = pneg %p130
    %p137 = scmp.eq.s32.totalorder %s11, 2
    %p138 = por %p136, %p137
    %p139 = scmp.ne.s32.totalorder %s131, %s134
    %p140 = scmp.eq.s32.totalorder %s11, 0
    %p141 = por %p139, %p140
    %p142 = scmp.ne.s32.totalorder %s131, %s134
    %p143 = scmp.eq.s32.totalorder %s16, 2
    %p144 = por %p142, %p143
    %p145 = scmp.ne.s32.totalorder %s134, %s135
    %p146 = scmp.eq.s32.totalorder %s16, 0
    %p147 = por %p145, %p146
    %p148 = scmp.ne.s32.totalorder %s134, %s135
    %p149 = scmp.eq.s32.totalorder %s17, 2
    %p150 = por %p148, %p149
    %p152 = scmp.ne.s32.totalorder %s135, %s151
    %p153 = scmp.eq.s32.totalorder %s17, 0
    %p154 = por %p152, %p153
    %p155 = scmp.le.s32.totalorder 1, %s11
    %p156 = scmp.lt.s32.totalorder %s11, 4
    %p157 = pnand %p155, %p156
    %p158 = pneg %p157
    // Predicated region
    $region9: #{pos2weight_forward.1} parent=5 // pred_check
      _
    $region10: #{pos2weight_forward.1} parent=5 // pred_check_branch
      %160 = sbr.rel (%p157) target = $region12
    $region11: #{pos2weight_forward.1} parent=5 // pred_region
      %s161 = ssub.s32 %s11, 1
      // Predicated region
      $region13: #{pos2weight_forward.1} parent=11 // pred_check
        %p162 = pneg %p58
      $region14: #{pos2weight_forward.1} parent=11 // pred_check_branch
        %164 = sbr.rel (%p162) target = $region16
      $region15: #{pos2weight_forward.1} parent=11 // pred_region
        _
      $region16: #{pos2weight_forward.1} parent=11 // pred_fallthru
        _
      // Predicated region
      $region17: #{pos2weight_forward.1} parent=11 // pred_check
        %p165 = pneg %p79
      $region18: #{pos2weight_forward.1} parent=11 // pred_check_branch
        %167 = sbr.rel (%p165) target = $region20
      $region19: #{pos2weight_forward.1} parent=11 // pred_region
        _
      $region20: #{pos2weight_forward.1} parent=11 // pred_fallthru
        _
      // Predicated region
      $region21: #{pos2weight_forward.1} parent=11 // pred_check
        %p168 = pneg %p100
      $region22: #{pos2weight_forward.1} parent=11 // pred_check_branch
        %170 = sbr.rel (%p168) target = $region24
      $region23: #{pos2weight_forward.1} parent=11 // pred_region
        _
      $region24: #{pos2weight_forward.1} parent=11 // pred_fallthru
        _
      // Predicated region
      $region25: #{pos2weight_forward.1} parent=11 // pred_check
        %p171 = pneg %p121
      $region26: #{pos2weight_forward.1} parent=11 // pred_check_branch
        %173 = sbr.rel (%p171) target = $region28
      $region27: #{pos2weight_forward.1} parent=11 // pred_region
        _
      $region28: #{pos2weight_forward.1} parent=11 // pred_fallthru
        _
    $region12: #{pos2weight_forward.1} parent=5 // pred_fallthru
      _
    %p174 = scmp.lt.s32.totalorder %s11, 3
    // Predicated region
    $region29: #{pos2weight_forward.1} parent=5 // pred_check
      %p175 = pneg %p174
    $region30: #{pos2weight_forward.1} parent=5 // pred_check_branch
      %177 = sbr.rel (%p175) target = $region32
    $region31: #{pos2weight_forward.1} parent=5 // pred_region
      // Predicated region
      $region33: #{pos2weight_forward.1} parent=31 // pred_check
        %p178 = pneg %p31
      $region34: #{pos2weight_forward.1} parent=31 // pred_check_branch
        %180 = sbr.rel (%p178) target = $region36
      $region35: #{pos2weight_forward.1} parent=31 // pred_region
        %s181 = smul.u32 16, %s11
        %p182 = scmp.lt.s32.totalorder %s181, 47
        %s183 = scalar_select %p182, %s181, 47
        %s184 = smul.addr %s183, 8
        %s185 = scalar_lea.vmem %s0, %s184
        %s186 = smul.u32 16, %s11
      $region36: #{pos2weight_forward.1} parent=31 // pred_fallthru
        _
    $region32: #{pos2weight_forward.1} parent=5 // pred_fallthru
      _
    %p187 = scmp.le.s32.totalorder 1, %s11
    %p188 = scmp.lt.s32.totalorder %s11, 4
    %p189 = pnand %p187, %p188
    %p190 = pneg %p189
    // Predicated region
    $region37: #{pos2weight_forward.1} parent=5 // pred_check
      _
    $region38: #{pos2weight_forward.1} parent=5 // pred_check_branch
      %192 = sbr.rel (%p189) target = $region40
    $region39: #{pos2weight_forward.1} parent=5 // pred_region
      %s193 = ssub.s32 %s11, 1
      %s194 = smul.u32 16, %s16
      %p195 = scmp.lt.s32.totalorder %s194, 47
      %s196 = scalar_select %p195, %s194, 47
      %s197 = smul.addr %s196, 8
      %s198 = scalar_lea.vmem %s0, %s197
      %p199 = pneg %p37
      %p200 = pneg %p34
      %p201 = pneg %p58
      %p202 = pneg %p55
      %p203 = pneg %p79
      %p204 = pneg %p76
      %p205 = pneg %p100
      %p206 = pneg %p97
      %p207 = pneg %p121
      %p208 = pneg %p118
      %p209 = pneg %p147
      %p210 = pneg %p144
      %s211 = smul.u32 16, %s16
      %p212 = scmp.lt.s32.totalorder %s211, 47
      %s213 = scalar_select %p212, %s211, 47
      %s214 = smul.addr %s213, 8
      %s215 = scalar_lea.vmem %s5, %s214
      %s216 = smul.u32 16, %s16
      %p217 = scmp.lt.s32.totalorder %s216, 47
      %s218 = scalar_select %p217, %s216, 47
      %s219 = smul.addr %s218, 8
      %s220 = scalar_lea.vmem %s0, %s219
      %s221 = smul.u32 16, %s16
      %s222 = smul.u32 16, %s16
      %p223 = scmp.lt.s32.totalorder %s222, 47
      %s224 = scalar_select %p223, %s222, 47
      %s225 = smul.addr %s224, 8
      %s226 = scalar_lea.vmem %s5, %s225
      %s227 = smul.u32 16, %s16
      %v229 = vld [vmem:[%s220] sm:$0xff]
      %v230 = vld [vmem:[%s220 + $0x8] sm:$0xff]
      %v231 = vld [vmem:[%s220 + $0x10] sm:$0xff]
      %v232 = vld [vmem:[%s220 + $0x18] sm:$0xff]
      %v233 = vld [vmem:[%s220 + $0x20] sm:$0xff]
      %v234 = vld [vmem:[%s220 + $0x28] sm:$0xff]
      %v235 = vld [vmem:[%s220 + $0x30] sm:$0xff]
      %v236 = vld [vmem:[%s220 + $0x38] sm:$0xff]
      %v237 = vld [vmem:[%s220 + $0x40] sm:$0xff]
      %v238 = vld [vmem:[%s220 + $0x48] sm:$0xff]
      %v239 = vld [vmem:[%s220 + $0x50] sm:$0xff]
      %v240 = vld [vmem:[%s220 + $0x58] sm:$0xff]
      %v241 = vld [vmem:[%s220 + $0x60] sm:$0xff]
      %v242 = vld [vmem:[%s220 + $0x68] sm:$0xff]
      %v243 = vld [vmem:[%s220 + $0x70] sm:$0xff]
      %v244 = vld [vmem:[%s220 + $0x78] sm:$0xff]
      %v245 = vld [vmem:[%s1] sm:$0x77]
      %v246 = vld [vmem:[%s2] sm:$0x3]
      %248 = vset.pattern.permute.xlu0 0
      %249 = vperm.xlu0 %248, %v229
      %v250 = vpop.permute.xlu0 %249
      %253 = vset.pattern.permute.xlu0 0
      %254 = vperm.xlu0 %253, %v230
      %v255 = vpop.permute.xlu0 %254
      %258 = vset.pattern.permute.xlu0 0
      %259 = vperm.xlu0 %258, %v231
      %v260 = vpop.permute.xlu0 %259
      %263 = vset.pattern.permute.xlu0 0
      %264 = vperm.xlu0 %263, %v232
      %v265 = vpop.permute.xlu0 %264
      %268 = vset.pattern.permute.xlu0 0
      %269 = vperm.xlu0 %268, %v233
      %v270 = vpop.permute.xlu0 %269
      %273 = vset.pattern.permute.xlu0 0
      %274 = vperm.xlu0 %273, %v234
      %v275 = vpop.permute.xlu0 %274
      %278 = vset.pattern.permute.xlu0 0
      %279 = vperm.xlu0 %278, %v235
      %v280 = vpop.permute.xlu0 %279
      %283 = vset.pattern.permute.xlu0 0
      %284 = vperm.xlu0 %283, %v236
      %v285 = vpop.permute.xlu0 %284
      %288 = vset.pattern.permute.xlu0 0
      %289 = vperm.xlu0 %288, %v237
      %v290 = vpop.permute.xlu0 %289
      %293 = vset.pattern.permute.xlu0 0
      %294 = vperm.xlu0 %293, %v238
      %v295 = vpop.permute.xlu0 %294
      %298 = vset.pattern.permute.xlu0 0
      %299 = vperm.xlu0 %298, %v239
      %v300 = vpop.permute.xlu0 %299
      %303 = vset.pattern.permute.xlu0 0
      %304 = vperm.xlu0 %303, %v240
      %v305 = vpop.permute.xlu0 %304
      %308 = vset.pattern.permute.xlu0 0
      %309 = vperm.xlu0 %308, %v241
      %v310 = vpop.permute.xlu0 %309
      %313 = vset.pattern.permute.xlu0 0
      %314 = vperm.xlu0 %313, %v242
      %v315 = vpop.permute.xlu0 %314
      %318 = vset.pattern.permute.xlu0 0
      %319 = vperm.xlu0 %318, %v243
      %v320 = vpop.permute.xlu0 %319
      %323 = vset.pattern.permute.xlu0 0
      %324 = vperm.xlu0 %323, %v244
      %v325 = vpop.permute.xlu0 %324
      %v328 = vlaneseq
      %v329 = vshrl.u32 %v328, 7
      %v330 = vsub.s32 0, %v329
      %v331 = vrot.slane %v245, %v330
      %v332 = vlaneseq
      %v333 = vshrl.u32 %v332, 7
      %v334 = vsub.s32 4, %v333
      %v335 = vrot.slane %v245, %v334
      %v338 = vlaneseq
      %v339 = vshrl.u32 %v338, 7
      %v340 = vsub.s32 0, %v339
      %v341 = vrot.slane %v331, %v340
      %v342 = vlaneseq
      %v343 = vshrl.u32 %v342, 7
      %v344 = vsub.s32 0, %v343
      %v345 = vrot.slane %v335, %v344
      %v346 = vmul.f32 %v250, %v341
      %v347 = vmul.f32 %v250, %v345
      %v348 = vmul.f32 %v255, %v341
      %v349 = vmul.f32 %v255, %v345
      %v350 = vmul.f32 %v260, %v341
      %v351 = vmul.f32 %v260, %v345
      %v352 = vmul.f32 %v265, %v341
      %v353 = vmul.f32 %v265, %v345
      %v354 = vmul.f32 %v270, %v341
      %v355 = vmul.f32 %v270, %v345
      %v356 = vmul.f32 %v275, %v341
      %v357 = vmul.f32 %v275, %v345
      %v358 = vmul.f32 %v280, %v341
      %v359 = vmul.f32 %v280, %v345
      %v360 = vmul.f32 %v285, %v341
      %v361 = vmul.f32 %v285, %v345
      %v362 = vmul.f32 %v290, %v341
      %v363 = vmul.f32 %v290, %v345
      %v364 = vmul.f32 %v295, %v341
      %v365 = vmul.f32 %v295, %v345
      %v366 = vmul.f32 %v300, %v341
      %v367 = vmul.f32 %v300, %v345
      %v368 = vmul.f32 %v305, %v341
      %v369 = vmul.f32 %v305, %v345
      %v370 = vmul.f32 %v310, %v341
      %v371 = vmul.f32 %v310, %v345
      %v372 = vmul.f32 %v315, %v341
      %v373 = vmul.f32 %v315, %v345
      %v374 = vmul.f32 %v320, %v341
      %v375 = vmul.f32 %v320, %v345
      %v376 = vmul.f32 %v325, %v341
      %v377 = vmul.f32 %v325, %v345
      %v379 = vlaneseq
      %v380 = vshrl.u32 %v379, 7
      %v381 = vsub.s32 0, %v380
      %v382 = vrot.slane %v246, %v381
      %v383 = vlaneseq
      %v384 = vshrl.u32 %v383, 7
      %v385 = vsub.s32 1, %v384
      %v386 = vrot.slane %v246, %v385
      %v389 = vadd.f32 %v382, %v346
      %v390 = vadd.f32 %v386, %v347
      %v391 = vadd.f32 %v382, %v348
      %v392 = vadd.f32 %v386, %v349
      %v393 = vadd.f32 %v382, %v350
      %v394 = vadd.f32 %v386, %v351
      %v395 = vadd.f32 %v382, %v352
      %v396 = vadd.f32 %v386, %v353
      %v397 = vadd.f32 %v382, %v354
      %v398 = vadd.f32 %v386, %v355
      %v399 = vadd.f32 %v382, %v356
      %v400 = vadd.f32 %v386, %v357
      %v401 = vadd.f32 %v382, %v358
      %v402 = vadd.f32 %v386, %v359
      %v403 = vadd.f32 %v382, %v360
      %v404 = vadd.f32 %v386, %v361
      %v405 = vadd.f32 %v382, %v362
      %v406 = vadd.f32 %v386, %v363
      %v407 = vadd.f32 %v382, %v364
      %v408 = vadd.f32 %v386, %v365
      %v409 = vadd.f32 %v382, %v366
      %v410 = vadd.f32 %v386, %v367
      %v411 = vadd.f32 %v382, %v368
      %v412 = vadd.f32 %v386, %v369
      %v413 = vadd.f32 %v382, %v370
      %v414 = vadd.f32 %v386, %v371
      %v415 = vadd.f32 %v382, %v372
      %v416 = vadd.f32 %v386, %v373
      %v417 = vadd.f32 %v382, %v374
      %v418 = vadd.f32 %v386, %v375
      %v419 = vadd.f32 %v382, %v376
      %v420 = vadd.f32 %v386, %v377
      %421 = vset.pattern.permute.xlu0 1
      %422 = vperm.xlu0 %421, %v229
      %v423 = vpop.permute.xlu0 %422
      %425 = vset.pattern.permute.xlu0 1
      %426 = vperm.xlu0 %425, %v230
      %v427 = vpop.permute.xlu0 %426
      %429 = vset.pattern.permute.xlu0 1
      %430 = vperm.xlu0 %429, %v231
      %v431 = vpop.permute.xlu0 %430
      %433 = vset.pattern.permute.xlu0 1
      %434 = vperm.xlu0 %433, %v232
      %v435 = vpop.permute.xlu0 %434
      %437 = vset.pattern.permute.xlu0 1
      %438 = vperm.xlu0 %437, %v233
      %v439 = vpop.permute.xlu0 %438
      %441 = vset.pattern.permute.xlu0 1
      %442 = vperm.xlu0 %441, %v234
      %v443 = vpop.permute.xlu0 %442
      %445 = vset.pattern.permute.xlu0 1
      %446 = vperm.xlu0 %445, %v235
      %v447 = vpop.permute.xlu0 %446
      %449 = vset.pattern.permute.xlu0 1
      %450 = vperm.xlu0 %449, %v236
      %v451 = vpop.permute.xlu0 %450
      %453 = vset.pattern.permute.xlu0 1
      %454 = vperm.xlu0 %453, %v237
      %v455 = vpop.permute.xlu0 %454
      %457 = vset.pattern.permute.xlu0 1
      %458 = vperm.xlu0 %457, %v238
      %v459 = vpop.permute.xlu0 %458
      %461 = vset.pattern.permute.xlu0 1
      %462 = vperm.xlu0 %461, %v239
      %v463 = vpop.permute.xlu0 %462
      %465 = vset.pattern.permute.xlu0 1
      %466 = vperm.xlu0 %465, %v240
      %v467 = vpop.permute.xlu0 %466
      %469 = vset.pattern.permute.xlu0 1
      %470 = vperm.xlu0 %469, %v241
      %v471 = vpop.permute.xlu0 %470
      %473 = vset.pattern.permute.xlu0 1
      %474 = vperm.xlu0 %473, %v242
      %v475 = vpop.permute.xlu0 %474
      %477 = vset.pattern.permute.xlu0 1
      %478 = vperm.xlu0 %477, %v243
      %v479 = vpop.permute.xlu0 %478
      %481 = vset.pattern.permute.xlu0 1
      %482 = vperm.xlu0 %481, %v244
      %v483 = vpop.permute.xlu0 %482
      %v485 = vlaneseq
      %v486 = vshrl.u32 %v485, 7
      %v487 = vsub.s32 1, %v486
      %v488 = vrot.slane %v245, %v487
      %v489 = vlaneseq
      %v490 = vshrl.u32 %v489, 7
      %v491 = vsub.s32 5, %v490
      %v492 = vrot.slane %v245, %v491
      %v495 = vlaneseq
      %v496 = vshrl.u32 %v495, 7
      %v497 = vsub.s32 1, %v496
      %v498 = vrot.slane %v488, %v497
      %v499 = vlaneseq
      %v500 = vshrl.u32 %v499, 7
      %v501 = vsub.s32 1, %v500
      %v502 = vrot.slane %v492, %v501
      %v503 = vmul.f32 %v423, %v498
      %v504 = vmul.f32 %v423, %v502
      %v505 = vmul.f32 %v427, %v498
      %v506 = vmul.f32 %v427, %v502
      %v507 = vmul.f32 %v431, %v498
      %v508 = vmul.f32 %v431, %v502
      %v509 = vmul.f32 %v435, %v498
      %v510 = vmul.f32 %v435, %v502
      %v511 = vmul.f32 %v439, %v498
      %v512 = vmul.f32 %v439, %v502
      %v513 = vmul.f32 %v443, %v498
      %v514 = vmul.f32 %v443, %v502
      %v515 = vmul.f32 %v447, %v498
      %v516 = vmul.f32 %v447, %v502
      %v517 = vmul.f32 %v451, %v498
      %v518 = vmul.f32 %v451, %v502
      %v519 = vmul.f32 %v455, %v498
      %v520 = vmul.f32 %v455, %v502
      %v521 = vmul.f32 %v459, %v498
      %v522 = vmul.f32 %v459, %v502
      %v523 = vmul.f32 %v463, %v498
      %v524 = vmul.f32 %v463, %v502
      %v525 = vmul.f32 %v467, %v498
      %v526 = vmul.f32 %v467, %v502
      %v527 = vmul.f32 %v471, %v498
      %v528 = vmul.f32 %v471, %v502
      %v529 = vmul.f32 %v475, %v498
      %v530 = vmul.f32 %v475, %v502
      %v531 = vmul.f32 %v479, %v498
      %v532 = vmul.f32 %v479, %v502
      %v533 = vmul.f32 %v483, %v498
      %v534 = vmul.f32 %v483, %v502
      %v535 = vadd.f32 %v389, %v503
      %v536 = vadd.f32 %v390, %v504
      %v537 = vadd.f32 %v391, %v505
      %v538 = vadd.f32 %v392, %v506
      %v539 = vadd.f32 %v393, %v507
      %v540 = vadd.f32 %v394, %v508
      %v541 = vadd.f32 %v395, %v509
      %v542 = vadd.f32 %v396, %v510
      %v543 = vadd.f32 %v397, %v511
      %v544 = vadd.f32 %v398, %v512
      %v545 = vadd.f32 %v399, %v513
      %v546 = vadd.f32 %v400, %v514
      %v547 = vadd.f32 %v401, %v515
      %v548 = vadd.f32 %v402, %v516
      %v549 = vadd.f32 %v403, %v517
      %v550 = vadd.f32 %v404, %v518
      %v551 = vadd.f32 %v405, %v519
      %v552 = vadd.f32 %v406, %v520
      %v553 = vadd.f32 %v407, %v521
      %v554 = vadd.f32 %v408, %v522
      %v555 = vadd.f32 %v409, %v523
      %v556 = vadd.f32 %v410, %v524
      %v557 = vadd.f32 %v411, %v525
      %v558 = vadd.f32 %v412, %v526
      %v559 = vadd.f32 %v413, %v527
      %v560 = vadd.f32 %v414, %v528
      %v561 = vadd.f32 %v415, %v529
      %v562 = vadd.f32 %v416, %v530
      %v563 = vadd.f32 %v417, %v531
      %v564 = vadd.f32 %v418, %v532
      %v565 = vadd.f32 %v419, %v533
      %v566 = vadd.f32 %v420, %v534
      %567 = vset.pattern.permute.xlu0 2
      %568 = vperm.xlu0 %567, %v229
      %v569 = vpop.permute.xlu0 %568
      %571 = vset.pattern.permute.xlu0 2
      %572 = vperm.xlu0 %571, %v230
      %v573 = vpop.permute.xlu0 %572
      %575 = vset.pattern.permute.xlu0 2
      %576 = vperm.xlu0 %575, %v231
      %v577 = vpop.permute.xlu0 %576
      %579 = vset.pattern.permute.xlu0 2
      %580 = vperm.xlu0 %579, %v232
      %v581 = vpop.permute.xlu0 %580
      %583 = vset.pattern.permute.xlu0 2
      %584 = vperm.xlu0 %583, %v233
      %v585 = vpop.permute.xlu0 %584
      %587 = vset.pattern.permute.xlu0 2
      %588 = vperm.xlu0 %587, %v234
      %v589 = vpop.permute.xlu0 %588
      %591 = vset.pattern.permute.xlu0 2
      %592 = vperm.xlu0 %591, %v235
      %v593 = vpop.permute.xlu0 %592
      %595 = vset.pattern.permute.xlu0 2
      %596 = vperm.xlu0 %595, %v236
      %v597 = vpop.permute.xlu0 %596
      %599 = vset.pattern.permute.xlu0 2
      %600 = vperm.xlu0 %599, %v237
      %v601 = vpop.permute.xlu0 %600
      %603 = vset.pattern.permute.xlu0 2
      %604 = vperm.xlu0 %603, %v238
      %v605 = vpop.permute.xlu0 %604
      %607 = vset.pattern.permute.xlu0 2
      %608 = vperm.xlu0 %607, %v239
      %v609 = vpop.permute.xlu0 %608
      %611 = vset.pattern.permute.xlu0 2
      %612 = vperm.xlu0 %611, %v240
      %v613 = vpop.permute.xlu0 %612
      %615 = vset.pattern.permute.xlu0 2
      %616 = vperm.xlu0 %615, %v241
      %v617 = vpop.permute.xlu0 %616
      %619 = vset.pattern.permute.xlu0 2
      %620 = vperm.xlu0 %619, %v242
      %v621 = vpop.permute.xlu0 %620
      %623 = vset.pattern.permute.xlu0 2
      %624 = vperm.xlu0 %623, %v243
      %v625 = vpop.permute.xlu0 %624
      %627 = vset.pattern.permute.xlu0 2
      %628 = vperm.xlu0 %627, %v244
      %v629 = vpop.permute.xlu0 %628
      %v631 = vlaneseq
      %v632 = vshrl.u32 %v631, 7
      %v633 = vsub.s32 2, %v632
      %v634 = vrot.slane %v245, %v633
      %v635 = vlaneseq
      %v636 = vshrl.u32 %v635, 7
      %v637 = vsub.s32 6, %v636
      %v638 = vrot.slane %v245, %v637
      %v641 = vlaneseq
      %v642 = vshrl.u32 %v641, 7
      %v643 = vsub.s32 2, %v642
      %v644 = vrot.slane %v634, %v643
      %v645 = vlaneseq
      %v646 = vshrl.u32 %v645, 7
      %v647 = vsub.s32 2, %v646
      %v648 = vrot.slane %v638, %v647
      %v649 = vmul.f32 %v569, %v644
      %v650 = vmul.f32 %v569, %v648
      %v651 = vmul.f32 %v573, %v644
      %v652 = vmul.f32 %v573, %v648
      %v653 = vmul.f32 %v577, %v644
      %v654 = vmul.f32 %v577, %v648
      %v655 = vmul.f32 %v581, %v644
      %v656 = vmul.f32 %v581, %v648
      %v657 = vmul.f32 %v585, %v644
      %v658 = vmul.f32 %v585, %v648
      %v659 = vmul.f32 %v589, %v644
      %v660 = vmul.f32 %v589, %v648
      %v661 = vmul.f32 %v593, %v644
      %v662 = vmul.f32 %v593, %v648
      %v663 = vmul.f32 %v597, %v644
      %v664 = vmul.f32 %v597, %v648
      %v665 = vmul.f32 %v601, %v644
      %v666 = vmul.f32 %v601, %v648
      %v667 = vmul.f32 %v605, %v644
      %v668 = vmul.f32 %v605, %v648
      %v669 = vmul.f32 %v609, %v644
      %v670 = vmul.f32 %v609, %v648
      %v671 = vmul.f32 %v613, %v644
      %v672 = vmul.f32 %v613, %v648
      %v673 = vmul.f32 %v617, %v644
      %v674 = vmul.f32 %v617, %v648
      %v675 = vmul.f32 %v621, %v644
      %v676 = vmul.f32 %v621, %v648
      %v677 = vmul.f32 %v625, %v644
      %v678 = vmul.f32 %v625, %v648
      %v679 = vmul.f32 %v629, %v644
      %v680 = vmul.f32 %v629, %v648
      %v681 = vadd.f32 %v535, %v649
      %v682 = vadd.f32 %v536, %v650
      %v683 = vadd.f32 %v537, %v651
      %v684 = vadd.f32 %v538, %v652
      %v685 = vadd.f32 %v539, %v653
      %v686 = vadd.f32 %v540, %v654
      %v687 = vadd.f32 %v541, %v655
      %v688 = vadd.f32 %v542, %v656
      %v689 = vadd.f32 %v543, %v657
      %v690 = vadd.f32 %v544, %v658
      %v691 = vadd.f32 %v545, %v659
      %v692 = vadd.f32 %v546, %v660
      %v693 = vadd.f32 %v547, %v661
      %v694 = vadd.f32 %v548, %v662
      %v695 = vadd.f32 %v549, %v663
      %v696 = vadd.f32 %v550, %v664
      %v697 = vadd.f32 %v551, %v665
      %v698 = vadd.f32 %v552, %v666
      %v699 = vadd.f32 %v553, %v667
      %v700 = vadd.f32 %v554, %v668
      %v701 = vadd.f32 %v555, %v669
      %v702 = vadd.f32 %v556, %v670
      %v703 = vadd.f32 %v557, %v671
      %v704 = vadd.f32 %v558, %v672
      %v705 = vadd.f32 %v559, %v673
      %v706 = vadd.f32 %v560, %v674
      %v707 = vadd.f32 %v561, %v675
      %v708 = vadd.f32 %v562, %v676
      %v709 = vadd.f32 %v563, %v677
      %v710 = vadd.f32 %v564, %v678
      %v711 = vadd.f32 %v565, %v679
      %v712 = vadd.f32 %v566, %v680
      %v713 = vmax.f32 %v681, 0.0
      %v714 = vmax.f32 %v682, 0.0
      %v715 = vmax.f32 %v683, 0.0
      %v716 = vmax.f32 %v684, 0.0
      %v717 = vmax.f32 %v685, 0.0
      %v718 = vmax.f32 %v686, 0.0
      %v719 = vmax.f32 %v687, 0.0
      %v720 = vmax.f32 %v688, 0.0
      %v721 = vmax.f32 %v689, 0.0
      %v722 = vmax.f32 %v690, 0.0
      %v723 = vmax.f32 %v691, 0.0
      %v724 = vmax.f32 %v692, 0.0
      %v725 = vmax.f32 %v693, 0.0
      %v726 = vmax.f32 %v694, 0.0
      %v727 = vmax.f32 %v695, 0.0
      %v728 = vmax.f32 %v696, 0.0
      %v729 = vmax.f32 %v697, 0.0
      %v730 = vmax.f32 %v698, 0.0
      %v731 = vmax.f32 %v699, 0.0
      %v732 = vmax.f32 %v700, 0.0
      %v733 = vmax.f32 %v701, 0.0
      %v734 = vmax.f32 %v702, 0.0
      %v735 = vmax.f32 %v703, 0.0
      %v736 = vmax.f32 %v704, 0.0
      %v737 = vmax.f32 %v705, 0.0
      %v738 = vmax.f32 %v706, 0.0
      %v739 = vmax.f32 %v707, 0.0
      %v740 = vmax.f32 %v708, 0.0
      %v741 = vmax.f32 %v709, 0.0
      %v742 = vmax.f32 %v710, 0.0
      %v743 = vmax.f32 %v711, 0.0
      %v744 = vmax.f32 %v712, 0.0
      %v745 = vpack.c.bf16 %v715, %v713
      %v746 = vpack.c.bf16 %v716, %v714
      %v747 = vpack.c.bf16 %v719, %v717
      %v748 = vpack.c.bf16 %v720, %v718
      %v749 = vpack.c.bf16 %v723, %v721
      %v750 = vpack.c.bf16 %v724, %v722
      %v751 = vpack.c.bf16 %v727, %v725
      %v752 = vpack.c.bf16 %v728, %v726
      %v753 = vpack.c.bf16 %v731, %v729
      %v754 = vpack.c.bf16 %v732, %v730
      %v755 = vpack.c.bf16 %v735, %v733
      %v756 = vpack.c.bf16 %v736, %v734
      %v757 = vpack.c.bf16 %v739, %v737
      %v758 = vpack.c.bf16 %v740, %v738
      %v759 = vpack.c.bf16 %v743, %v741
      %v760 = vpack.c.bf16 %v744, %v742
      %v761 = vld [vmem:[%s3] sm:$0xf]
      %v762 = vld [vmem:[%s3 + $0x4] sm:$0xf]
      %v763 = vld [vmem:[%s3 + $0x8] sm:$0xf]
      %v764 = vld [vmem:[%s3 + $0xc] sm:$0xf]
      %v765 = vld [vmem:[%s3 + $0x10] sm:$0xf]
      %v766 = vld [vmem:[%s3 + $0x14] sm:$0xf]
      %v767 = vld [vmem:[%s3 + $0x18] sm:$0xf]
      %v768 = vld [vmem:[%s3 + $0x1c] sm:$0xf]
      %v769 = vld [vmem:[%s3 + $0x20] sm:$0xf]
      %v770 = vld [vmem:[%s3 + $0x24] sm:$0xf]
      %v771 = vld [vmem:[%s3 + $0x28] sm:$0xf]
      %v772 = vld [vmem:[%s3 + $0x2c] sm:$0xf]
      %v773 = vld [vmem:[%s3 + $0x30] sm:$0xf]
      %v774 = vld [vmem:[%s3 + $0x34] sm:$0xf]
      %v775 = vld [vmem:[%s3 + $0x38] sm:$0xf]
      %v776 = vld [vmem:[%s3 + $0x3c] sm:$0xf]
      %v777 = vld [vmem:[%s3 + $0x40] sm:$0xf]
      %v778 = vld [vmem:[%s3 + $0x44] sm:$0xf]
      %v779 = vld [vmem:[%s3 + $0x48] sm:$0xf]
      %v780 = vld [vmem:[%s3 + $0x4c] sm:$0xf]
      %v781 = vld [vmem:[%s3 + $0x50] sm:$0xf]
      %v782 = vld [vmem:[%s3 + $0x54] sm:$0xf]
      %v783 = vld [vmem:[%s3 + $0x58] sm:$0xf]
      %v784 = vld [vmem:[%s3 + $0x5c] sm:$0xf]
      %v785 = vld [vmem:[%s3 + $0x60] sm:$0xf]
      %v786 = vld [vmem:[%s3 + $0x64] sm:$0xf]
      %v787 = vld [vmem:[%s3 + $0x68] sm:$0xf]
      %v788 = vld [vmem:[%s3 + $0x6c] sm:$0xf]
      %v789 = vld [vmem:[%s3 + $0x70] sm:$0xf]
      %v790 = vld [vmem:[%s3 + $0x74] sm:$0xf]
      %v791 = vld [vmem:[%s3 + $0x78] sm:$0xf]
      %v792 = vld [vmem:[%s3 + $0x7c] sm:$0xf]
      %v793 = vld [vmem:[%s4] sm:$0x1]
      %v795 = vlaneseq
      %v796 = vshrl.u32 %v795, 7
      %v797 = vsub.s32 0, %v796
      %v798 = vrot.slane %v793, %v797
      %v832 = vunpack.c.l.b16 %v761
      %v833 = vunpack.c.l.b16 %v762
      %v834 = vunpack.c.l.b16 %v763
      %v835 = vunpack.c.l.b16 %v764
      %v836 = vunpack.c.l.b16 %v765
      %v837 = vunpack.c.l.b16 %v766
      %v838 = vunpack.c.l.b16 %v767
      %v839 = vunpack.c.l.b16 %v768
      %v840 = vunpack.c.l.b16 %v769
      %v841 = vunpack.c.l.b16 %v770
      %v842 = vunpack.c.l.b16 %v771
      %v843 = vunpack.c.l.b16 %v772
      %v844 = vunpack.c.l.b16 %v773
      %v845 = vunpack.c.l.b16 %v774
      %v846 = vunpack.c.l.b16 %v775
      %v847 = vunpack.c.l.b16 %v776
      %v848 = vunpack.c.l.b16 %v777
      %v849 = vunpack.c.l.b16 %v778
      %v850 = vunpack.c.l.b16 %v779
      %v851 = vunpack.c.l.b16 %v780
      %v852 = vunpack.c.l.b16 %v781
      %v853 = vunpack.c.l.b16 %v782
      %v854 = vunpack.c.l.b16 %v783
      %v855 = vunpack.c.l.b16 %v784
      %v856 = vunpack.c.l.b16 %v785
      %v857 = vunpack.c.l.b16 %v786
      %v858 = vunpack.c.l.b16 %v787
      %v859 = vunpack.c.l.b16 %v788
      %v860 = vunpack.c.l.b16 %v789
      %v861 = vunpack.c.l.b16 %v790
      %v862 = vunpack.c.l.b16 %v791
      %v863 = vunpack.c.l.b16 %v792
      %v864 = vpack.c.b16 %v833, %v832
      %v865 = vpack.c.b16 %v835, %v834
      %v866 = vpack.c.b16 %v837, %v836
      %v867 = vpack.c.b16 %v839, %v838
      %v868 = vpack.c.b16 %v841, %v840
      %v869 = vpack.c.b16 %v843, %v842
      %v870 = vpack.c.b16 %v845, %v844
      %v871 = vpack.c.b16 %v847, %v846
      %v872 = vpack.c.b16 %v849, %v848
      %v873 = vpack.c.b16 %v851, %v850
      %v874 = vpack.c.b16 %v853, %v852
      %v875 = vpack.c.b16 %v855, %v854
      %v876 = vpack.c.b16 %v857, %v856
      %v877 = vpack.c.b16 %v859, %v858
      %v878 = vpack.c.b16 %v861, %v860
      %v879 = vpack.c.b16 %v863, %v862
      %896 = vmatprep.subr.bf16.mxu0 0
      %897 = vmatpush1.bf16.msra.mxu0 %v871
      %898 = vmatprep.subr.bf16.mxu0 0
      %899 = vmatpush1.bf16.msra.mxu0 %v870
      %900 = vmatprep.subr.bf16.mxu0 0
      %901 = vmatpush1.bf16.msra.mxu0 %v869
      %902 = vmatprep.subr.bf16.mxu0 0
      %903 = vmatpush1.bf16.msra.mxu0 %v868
      %904 = vmatprep.subr.bf16.mxu0 0
      %905 = vmatpush1.bf16.msra.mxu0 %v867
      %906 = vmatprep.subr.bf16.mxu0 0
      %907 = vmatpush1.bf16.msra.mxu0 %v866
      %908 = vmatprep.subr.bf16.mxu0 0
      %909 = vmatpush1.bf16.msra.mxu0 %v865
      %910 = vmatprep.subr.bf16.mxu0 0
      %911 = vmatpush1.bf16.msra.mxu0 %v864
      %912 = vmatprep.subr.bf16.mxu0 0
      %913 = vmatpush2.bf16.msra.mxu0 %v879
      %914 = vmatprep.subr.bf16.mxu0 0
      %915 = vmatpush2.bf16.msra.mxu0 %v878
      %916 = vmatprep.subr.bf16.mxu0 0
      %917 = vmatpush2.bf16.msra.mxu0 %v877
      %918 = vmatprep.subr.bf16.mxu0 0
      %919 = vmatpush2.bf16.msra.mxu0 %v876
      %920 = vmatprep.subr.bf16.mxu0 0
      %921 = vmatpush2.bf16.msra.mxu0 %v875
      %922 = vmatprep.subr.bf16.mxu0 0
      %923 = vmatpush2.bf16.msra.mxu0 %v874
      %924 = vmatprep.subr.bf16.mxu0 0
      %925 = vmatpush2.bf16.msra.mxu0 %v873
      %926 = vmatprep.subr.bf16.mxu0 0
      %927 = vmatpush2.bf16.msra.mxu0 %v872
      %928 = vmatprep.mubr.bf16.mxu0 %v746
      %929 = vmatmul.mubr.bf16.gmra.mxu0 %v745
      %v930 = vpop.f32.mrf.mxu0
      %v931 = vadd.f32 %v798, %v930
      %v932 = vpop.f32.mrf.mxu0
      %v933 = vpop.f32.mrf.mxu0
      %v934 = vadd.f32 %v798, %v933
      %v935 = vpop.f32.mrf.mxu0
      %936 = vmatprep.mubr.bf16.mxu0 %v748
      %937 = vmatmul.mubr.bf16.gmra.mxu0 %v747
      %v938 = vpop.f32.mrf.mxu0
      %v939 = vadd.f32 %v798, %v938
      %v940 = vpop.f32.mrf.mxu0
      %v941 = vpop.f32.mrf.mxu0
      %v942 = vadd.f32 %v798, %v941
      %v943 = vpop.f32.mrf.mxu0
      %944 = vmatprep.mubr.bf16.mxu0 %v750
      %945 = vmatmul.mubr.bf16.gmra.mxu0 %v749
      %v946 = vpop.f32.mrf.mxu0
      %v947 = vadd.f32 %v798, %v946
      %v948 = vpop.f32.mrf.mxu0
      %v949 = vpop.f32.mrf.mxu0
      %v950 = vadd.f32 %v798, %v949
      %v951 = vpop.f32.mrf.mxu0
      %952 = vmatprep.mubr.bf16.mxu0 %v752
      %953 = vmatmul.mubr.bf16.gmra.mxu0 %v751
      %v954 = vpop.f32.mrf.mxu0
      %v955 = vadd.f32 %v798, %v954
      %v956 = vpop.f32.mrf.mxu0
      %v957 = vpop.f32.mrf.mxu0
      %v958 = vadd.f32 %v798, %v957
      %v959 = vpop.f32.mrf.mxu0
      %960 = vmatprep.mubr.bf16.mxu0 %v754
      %961 = vmatmul.mubr.bf16.gmra.mxu0 %v753
      %v962 = vpop.f32.mrf.mxu0
      %v963 = vadd.f32 %v798, %v962
      %v964 = vpop.f32.mrf.mxu0
      %v965 = vpop.f32.mrf.mxu0
      %v966 = vadd.f32 %v798, %v965
      %v967 = vpop.f32.mrf.mxu0
      %968 = vmatprep.mubr.bf16.mxu0 %v756
      %969 = vmatmul.mubr.bf16.gmra.mxu0 %v755
      %v970 = vpop.f32.mrf.mxu0
      %v971 = vadd.f32 %v798, %v970
      %v972 = vpop.f32.mrf.mxu0
      %v973 = vpop.f32.mrf.mxu0
      %v974 = vadd.f32 %v798, %v973
      %v975 = vpop.f32.mrf.mxu0
      %976 = vmatprep.mubr.bf16.mxu0 %v758
      %977 = vmatmul.mubr.bf16.gmra.mxu0 %v757
      %v978 = vpop.f32.mrf.mxu0
      %v979 = vadd.f32 %v798, %v978
      %v980 = vpop.f32.mrf.mxu0
      %v981 = vpop.f32.mrf.mxu0
      %v982 = vadd.f32 %v798, %v981
      %v983 = vpop.f32.mrf.mxu0
      %984 = vmatprep.mubr.bf16.mxu0 %v760
      %985 = vmatmul.mubr.bf16.gmra.mxu0 %v759
      %v986 = vpop.f32.mrf.mxu0
      %v987 = vadd.f32 %v798, %v986
      %v988 = vpop.f32.mrf.mxu0
      %v989 = vpop.f32.mrf.mxu0
      %v990 = vadd.f32 %v798, %v989
      %v991 = vpop.f32.mrf.mxu0
      %992 = vdwg.mxu0
      %993 = vst [vmem:[%s226] sm:$0xff] %v931
      %994 = vst [vmem:[%s226 + $0x8] sm:$0xff] %v934
      %995 = vst [vmem:[%s226 + $0x10] sm:$0xff] %v939
      %996 = vst [vmem:[%s226 + $0x18] sm:$0xff] %v942
      %997 = vst [vmem:[%s226 + $0x20] sm:$0xff] %v947
      %998 = vst [vmem:[%s226 + $0x28] sm:$0xff] %v950
      %999 = vst [vmem:[%s226 + $0x30] sm:$0xff] %v955
      %1000 = vst [vmem:[%s226 + $0x38] sm:$0xff] %v958
      %1001 = vst [vmem:[%s226 + $0x40] sm:$0xff] %v963
      %1002 = vst [vmem:[%s226 + $0x48] sm:$0xff] %v966
      %1003 = vst [vmem:[%s226 + $0x50] sm:$0xff] %v971
      %1004 = vst [vmem:[%s226 + $0x58] sm:$0xff] %v974
      %1005 = vst [vmem:[%s226 + $0x60] sm:$0xff] %v979
      %1006 = vst [vmem:[%s226 + $0x68] sm:$0xff] %v982
      %1007 = vst [vmem:[%s226 + $0x70] sm:$0xff] %v987
      %1008 = vst [vmem:[%s226 + $0x78] sm:$0xff] %v990
      %s1009 = smul.u32 16, %s16
      %p1010 = scmp.lt.s32.totalorder %s1009, 47
      %s1011 = scalar_select %p1010, %s1009, 47
      %s1012 = smul.addr %s1011, 8
      %s1013 = scalar_lea.vmem %s5, %s1012
      // Predicated region
      $region41: #{pos2weight_forward.1} parent=39 // pred_check
        %p1014 = pneg %p144
      $region42: #{pos2weight_forward.1} parent=39 // pred_check_branch
        %1016 = sbr.rel (%p1014) target = $region44
      $region43: #{pos2weight_forward.1} parent=39 // pred_region
        %s1017 = smul.u32 16, %s16
      $region44: #{pos2weight_forward.1} parent=39 // pred_fallthru
        _
    $region40: #{pos2weight_forward.1} parent=5 // pred_fallthru
      _
    %p1018 = scmp.le.s32.totalorder 2, %s11
    // Predicated region
    $region45: #{pos2weight_forward.1} parent=5 // pred_check
      %p1019 = pneg %p1018
    $region46: #{pos2weight_forward.1} parent=5 // pred_check_branch
      %1021 = sbr.rel (%p1019) target = $region48
    $region47: #{pos2weight_forward.1} parent=5 // pred_region
      %s1022 = ssub.s32 %s11, 2
      // Predicated region
      $region49: #{pos2weight_forward.1} parent=47 // pred_check
        %p1023 = pneg %p150
      $region50: #{pos2weight_forward.1} parent=47 // pred_check_branch
        %1025 = sbr.rel (%p1023) target = $region52
      $region51: #{pos2weight_forward.1} parent=47 // pred_region
        %s1026 = smul.u32 16, %s17
        %p1027 = scmp.lt.s32.totalorder %s1026, 47
        %s1028 = scalar_select %p1027, %s1026, 47
        %s1029 = smul.addr %s1028, 8
        %s1030 = scalar_lea.vmem %s5, %s1029
      $region52: #{pos2weight_forward.1} parent=47 // pred_fallthru
        _
    $region48: #{pos2weight_forward.1} parent=5 // pred_fallthru
      _
  $region6: #{pos2weight_forward.1} parent=0 // loop_footer
    %s15 = sadd.s32 1, %s11
  $region7: #{pos2weight_forward.1} parent=0 // loop_footer_branch
    %10 = sbr.rel target = $region3
  $region8: #{pos2weight_forward.1} parent=0 // loop_exit
    _

</llo_original>
